<compile_context>
chip_gen: v7x
topology: tpu7x:2x2x1
jax: 0.10.0
libtpu: 0.0.40
codegen_flags: <defaults>
</compile_context>

<pallas_src>
import functools

import jax
import jax.numpy as jnp
from jax.experimental import pallas as pl
from jax.experimental.pallas import tpu as pltpu

_LN_EPS = 1e-5


def _layernorm(v, gamma, beta):
    """LayerNorm over last dim (torch eps=1e-5), one-pass variance.

    mean and E[x^2] are independent row reductions -> dual-issue on the XLU
    instead of serializing through a materialized `centered` tensor.
    Cancellation is negligible at LayerNorm-input magnitudes (eps dominates).
    """
    mean = jnp.mean(v, axis=-1, keepdims=True)
    mean_sq = jnp.mean(v * v, axis=-1, keepdims=True)
    var = mean_sq - mean * mean
    return (v - mean) * jax.lax.rsqrt(var + _LN_EPS) * gamma + beta


def _shared_layer_kernel(x_ref, w_in_ref, w_blk_ref, vec_ref, out_ref):
    """Fused SimplifiedSharedLayer forward (eval mode) on one batch tile.

    x_ref:     (BB, F)       input tile (batch-tiled by the grid)
    w_in_ref:  (F, H)        input projection weight, stored (fan_in, fan_out)
    w_blk_ref: (2*NB, H, H)  stacked [fc1_0, fc2_0, fc1_1, fc2_1, ...] weights
    vec_ref:   (NV, H)       stacked H-vectors (sublane-padded):
                               row 0: b_in, 1: g_in, 2: be_in
                               rows 3+6i .. 8+6i: b1, g1, be1, b2, g2, be2 of block i
    out_ref:   (BB, H)       output tile
    """
    x = x_ref[...]
    vecs = vec_ref[...]

    def row(i):                       # static row slice -> (1, H)
        return vecs[i:i + 1, :]

    # Input projection -> ReLU -> LayerNorm -> (Dropout = identity in eval)
    h = jnp.dot(x, w_in_ref[...], preferred_element_type=jnp.float32)
    h = jnp.maximum(h + row(0), 0.0)
    h = _layernorm(h, row(1), row(2))

    # Residual blocks (static Python unroll; count is compile-time known).
    num_blocks = w_blk_ref.shape[0] // 2
    for i in range(num_blocks):
        base = 3 + 6 * i
        residual = h
        o = jnp.dot(h, w_blk_ref[2 * i], preferred_element_type=jnp.float32)
        o = jnp.maximum(o + row(base + 0), 0.0)
        o = _layernorm(o, row(base + 1), row(base + 2))
        # drop -> identity (eval)
        o = jnp.dot(o, w_blk_ref[2 * i + 1], preferred_element_type=jnp.float32)
        o = jnp.maximum(o + row(base + 3), 0.0)
        o = _layernorm(o, row(base + 4), row(base + 5))
        # drop -> identity (eval)
        h = o + residual

    out_ref[...] = h.astype(out_ref.dtype)


def shared_layer_forward(x, params, *, block_b=None):
    """Runs the whole SimplifiedSharedLayer forward in one pallas_call."""
    B, F = x.shape
    H = params["w_in"].shape[1]
    NB = params["w_blk"].shape[0] // 2

    if block_b is None:
        # Whole batch in one tile when small; cap at 256 so M matches the
        # 256-row MXU (v6e/v7x) without forcing vreg spills from the three
        # live (block_b, H) f32 intermediates.  Batches >= 512 get >= 2 grid
        # steps so v7x's two TensorCores both participate.
        block_b = min(B, 256)
        block_b = max(8, ((block_b + 7) // 8) * 8)   # sublane-align

    grid_b = pl.cdiv(B, block_b)
    B_pad = grid_b * block_b
    x_in = x if B_pad == B else jnp.pad(x, ((0, B_pad - B), (0, 0)))

    # Advisory cost hint so XLA can overlap this small custom call.
    flops = 2 * B_pad * H * (F + 2 * NB * H)
    transcendentals = B_pad * (1 + 2 * NB)           # one rsqrt per row per LayerNorm
    bytes_accessed = 4 * (x_in.size + B_pad * H + params["w_in"].size
                          + params["w_blk"].size + params["vecs"].size)

    out = pl.pallas_call(
        _shared_layer_kernel,
        out_shape=jax.ShapeDtypeStruct((B_pad, H), x.dtype),
        grid=(grid_b,),
        in_specs=[
            pl.BlockSpec((block_b, F), lambda i: (i, 0)),               # x (batch-tiled)
            pl.BlockSpec((F, H), lambda i: (0, 0)),                     # w_in (resident)
            pl.BlockSpec(params["w_blk"].shape, lambda i: (0, 0, 0)),   # stacked weights
            pl.BlockSpec(params["vecs"].shape, lambda i: (0, 0)),       # stacked vectors
        ],
        out_specs=pl.BlockSpec((block_b, H), lambda i: (i, 0)),
        compiler_params=pltpu.CompilerParams(
            dimension_semantics=("parallel",)),
        cost_estimate=pl.CostEstimate(
            flops=flops, transcendentals=transcendentals,
            bytes_accessed=bytes_accessed),
    )(x_in, params["w_in"], params["w_blk"], params["vecs"])

    return out if B_pad == B else out[:B]


shared_layer_forward_jit = jax.jit(shared_layer_forward)


def init_params(key, in_features, hidden_dim, num_res_blocks=2):
    """Deterministic init mirroring nn.Linear / nn.LayerNorm shapes.

    Linear weights are stored transposed as (fan_in, fan_out) so the kernel
    computes x @ W directly.  All H-vectors (biases, gammas, betas) are packed
    into a single (NV, H) array; all residual-block weights into (2*NB, H, H).
    """
    def linear(key, fan_in, fan_out):
        wk, bk = jax.random.split(key)
        bound = 1.0 / jnp.sqrt(jnp.float32(fan_in))
        w = jax.random.uniform(wk, (fan_in, fan_out), jnp.float32, -bound, bound)
        b = jax.random.uniform(bk, (fan_out,), jnp.float32, -bound, bound)
        return w, b

    key, k_in = jax.random.split(key)
    w_in, b_in = linear(k_in, in_features, hidden_dim)

    ones = jnp.ones((hidden_dim,), jnp.float32)
    zeros = jnp.zeros((hidden_dim,), jnp.float32)

    vec_rows = [b_in, ones, zeros]          # b_in, g_in, be_in
    w_rows = []
    for _ in range(num_res_blocks):
        key, k1, k2 = jax.random.split(key, 3)
        w1, b1 = linear(k1, hidden_dim, hidden_dim)
        w2, b2 = linear(k2, hidden_dim, hidden_dim)
        w_rows += [w1, w2]
        vec_rows += [b1, ones, zeros, b2, ones, zeros]

    vecs = jnp.stack(vec_rows, axis=0)      # (3 + 6*NB, H)
    nv = vecs.shape[0]
    nv_pad = ((nv + 7) // 8) * 8            # sublane-align the vector stack
    if nv_pad != nv:
        vecs = jnp.pad(vecs, ((0, nv_pad - nv), (0, 0)))

    return {
        "w_in": w_in,                       # (F, H)
        "w_blk": jnp.stack(w_rows, axis=0), # (2*NB, H, H)
        "vecs": vecs,                       # (NV, H)
    }


def _reference_forward(x, params):
    """Pure-JAX reference of the PyTorch forward (eval mode)."""
    dot = functools.partial(jnp.dot, precision=jax.lax.Precision.HIGHEST)

    def ln(v, g, b):
        m = jnp.mean(v, axis=-1, keepdims=True)
        var = jnp.mean((v - m) ** 2, axis=-1, keepdims=True)
        return (v - m) / jnp.sqrt(var + _LN_EPS) * g + b

    vecs = params["vecs"]
    w_blk = params["w_blk"]
    nb = w_blk.shape[0] // 2

    h = jnp.maximum(dot(x, params["w_in"]) + vecs[0], 0.0)
    h = ln(h, vecs[1], vecs[2])
    for i in range(nb):
        base = 3 + 6 * i
        res = h
        o = jnp.maximum(dot(h, w_blk[2 * i]) + vecs[base + 0], 0.0)
        o = ln(o, vecs[base + 1], vecs[base + 2])
        o = jnp.maximum(dot(o, w_blk[2 * i + 1]) + vecs[base + 3], 0.0)
        o = ln(o, vecs[base + 4], vecs[base + 5])
        h = o + res
    return h


if __name__ == "__main__":
    key = jax.random.PRNGKey(0)
    kx, kp = jax.random.split(key)

    batch = 16
    in_features = 32
    hidden_dim = 128      # lane-dense (multiple of 128) -> unmasked vector stores
    num_res_blocks = 2

    x = jax.random.normal(kx, (batch, in_features), jnp.float32)
    params = init_params(kp, in_features, hidden_dim, num_res_blocks)

    out = shared_layer_forward_jit(x, params)
    out = jax.block_until_ready(out)
    assert out.shape == (batch, hidden_dim), out.shape

    ref = _reference_forward(x, params)
    max_err = float(jnp.max(jnp.abs(out - ref)))
    assert jnp.allclose(out, ref, atol=1e-4, rtol=1e-4), max_err

    # Ragged-batch path: batch not a multiple of the tile is padded internally
    # and the output is sliced back.
    x2 = jax.random.normal(kx, (batch + 3, in_features), jnp.float32)
    out2 = jax.block_until_ready(shared_layer_forward_jit(x2, params))
    ref2 = _reference_forward(x2, params)
    assert out2.shape == (batch + 3, hidden_dim), out2.shape
    assert jnp.allclose(out2, ref2, atol=1e-4, rtol=1e-4)

    print("KERNEL_OK")
</pallas_src>

<mosaic_0001>
module attributes {stable_mosaic.version = 11 : i64} {
  func.func @_shared_layer_kernel(%arg0: i32, %arg1: memref<16x32xf32, #tpu.memory_space<vmem>>, %arg2: memref<32x128xf32, #tpu.memory_space<vmem>>, %arg3: memref<4x128x128xf32, #tpu.memory_space<vmem>>, %arg4: memref<16x128xf32, #tpu.memory_space<vmem>>, %arg5: memref<16x128xf32, #tpu.memory_space<vmem>>) attributes {dimension_semantics = [#tpu.dimension_semantics<parallel>], iteration_bounds = array<i64: 1>, scalar_prefetch = 0 : i64, scratch_operands = 0 : i64, tpu.core_type = #tpu.core_type<tc>, window_params = [{transform_indices = @transform_0, window_bounds = array<i64: 16, 32>}, {pipeline_mode = #tpu.pipeline_mode<synchronous>, transform_indices = @transform_1, window_bounds = array<i64: 32, 128>}, {pipeline_mode = #tpu.pipeline_mode<synchronous>, transform_indices = @transform_2, window_bounds = array<i64: 4, 128, 128>}, {pipeline_mode = #tpu.pipeline_mode<synchronous>, transform_indices = @transform_3, window_bounds = array<i64: 16, 128>}, {transform_indices = @transform_4, window_bounds = array<i64: 16, 128>}]} {
    %c0 = arith.constant 0 : index
    %c0_0 = arith.constant 0 : index
    %0 = vector.load %arg1[%c0, %c0_0] : memref<16x32xf32, #tpu.memory_space<vmem>>, vector<16x32xf32>
    %c0_1 = arith.constant 0 : index
    %c0_2 = arith.constant 0 : index
    %1 = vector.load %arg4[%c0_1, %c0_2] : memref<16x128xf32, #tpu.memory_space<vmem>>, vector<16x128xf32>
    %c0_3 = arith.constant 0 : index
    %c0_4 = arith.constant 0 : index
    %2 = vector.load %arg2[%c0_3, %c0_4] : memref<32x128xf32, #tpu.memory_space<vmem>>, vector<32x128xf32>
    %cst = arith.constant dense<0.000000e+00> : vector<16x128xf32>
    %3 = tpu.matmul %0, %2, %cst {dimension_numbers = #tpu.dot_dimension_numbers<[1], [0], [0], [1], [0, 0, 1, 1], [], []>} : vector<16x32xf32>, vector<32x128xf32>, vector<16x128xf32> -> vector<16x128xf32>
    %4 = vector.extract_strided_slice %1 {offsets = [0, 0], sizes = [1, 128], strides = [1, 1]} : vector<16x128xf32> to vector<1x128xf32>
    %5 = vector.broadcast %4 : vector<1x128xf32> to vector<16x128xf32>
    %6 = arith.addf %3, %5 : vector<16x128xf32>
    %cst_5 = arith.constant 0.000000e+00 : f32
    %7 = vector.broadcast %cst_5 : f32 to vector<16x128xf32>
    %8 = arith.maximumf %6, %7 : vector<16x128xf32>
    %9 = vector.extract_strided_slice %1 {offsets = [1, 0], sizes = [1, 128], strides = [1, 1]} : vector<16x128xf32> to vector<1x128xf32>
    %10 = vector.extract_strided_slice %1 {offsets = [2, 0], sizes = [1, 128], strides = [1, 1]} : vector<16x128xf32> to vector<1x128xf32>
    %cst_6 = arith.constant dense<0.000000e+00> : vector<16xf32>
    %11 = vector.multi_reduction <add>, %8, %cst_6 [1] : vector<16x128xf32> to vector<16xf32>
    %12 = vector.shape_cast %11 : vector<16xf32> to vector<16x1xf32>
    %cst_7 = arith.constant 1.280000e+02 : f32
    %13 = vector.broadcast %cst_7 : f32 to vector<16x1xf32>
    %14 = arith.divf %12, %13 : vector<16x1xf32>
    %15 = arith.mulf %8, %8 : vector<16x128xf32>
    %cst_8 = arith.constant dense<0.000000e+00> : vector<16xf32>
    %16 = vector.multi_reduction <add>, %15, %cst_8 [1] : vector<16x128xf32> to vector<16xf32>
    %17 = vector.shape_cast %16 : vector<16xf32> to vector<16x1xf32>
    %cst_9 = arith.constant 1.280000e+02 : f32
    %18 = vector.broadcast %cst_9 : f32 to vector<16x1xf32>
    %19 = arith.divf %17, %18 : vector<16x1xf32>
    %20 = arith.mulf %14, %14 : vector<16x1xf32>
    %21 = arith.subf %19, %20 : vector<16x1xf32>
    %22 = vector.broadcast %14 : vector<16x1xf32> to vector<16x128xf32>
    %23 = arith.subf %8, %22 : vector<16x128xf32>
    %cst_10 = arith.constant 9.99999974E-6 : f32
    %24 = vector.broadcast %cst_10 : f32 to vector<16x1xf32>
    %25 = arith.addf %21, %24 : vector<16x1xf32>
    %26 = math.rsqrt %25 : vector<16x1xf32>
    %27 = vector.broadcast %26 : vector<16x1xf32> to vector<16x128xf32>
    %28 = arith.mulf %23, %27 : vector<16x128xf32>
    %29 = vector.broadcast %9 : vector<1x128xf32> to vector<16x128xf32>
    %30 = arith.mulf %28, %29 : vector<16x128xf32>
    %31 = vector.broadcast %10 : vector<1x128xf32> to vector<16x128xf32>
    %32 = arith.addf %30, %31 : vector<16x128xf32>
    %c0_11 = arith.constant 0 : index
    %c0_12 = arith.constant 0 : index
    %c0_13 = arith.constant 0 : index
    %33 = vector.load %arg3[%c0_11, %c0_12, %c0_13] : memref<4x128x128xf32, #tpu.memory_space<vmem>>, vector<1x128x128xf32>
    %34 = vector.shape_cast %33 : vector<1x128x128xf32> to vector<128x128xf32>
    %cst_14 = arith.constant dense<0.000000e+00> : vector<16x128xf32>
    %35 = tpu.matmul %32, %34, %cst_14 {dimension_numbers = #tpu.dot_dimension_numbers<[1], [0], [0], [1], [0, 0, 1, 1], [], []>} : vector<16x128xf32>, vector<128x128xf32>, vector<16x128xf32> -> vector<16x128xf32>
    %36 = vector.extract_strided_slice %1 {offsets = [3, 0], sizes = [1, 128], strides = [1, 1]} : vector<16x128xf32> to vector<1x128xf32>
    %37 = vector.broadcast %36 : vector<1x128xf32> to vector<16x128xf32>
    %38 = arith.addf %35, %37 : vector<16x128xf32>
    %cst_15 = arith.constant 0.000000e+00 : f32
    %39 = vector.broadcast %cst_15 : f32 to vector<16x128xf32>
    %40 = arith.maximumf %38, %39 : vector<16x128xf32>
    %41 = vector.extract_strided_slice %1 {offsets = [4, 0], sizes = [1, 128], strides = [1, 1]} : vector<16x128xf32> to vector<1x128xf32>
    %42 = vector.extract_strided_slice %1 {offsets = [5, 0], sizes = [1, 128], strides = [1, 1]} : vector<16x128xf32> to vector<1x128xf32>
    %cst_16 = arith.constant dense<0.000000e+00> : vector<16xf32>
    %43 = vector.multi_reduction <add>, %40, %cst_16 [1] : vector<16x128xf32> to vector<16xf32>
    %44 = vector.shape_cast %43 : vector<16xf32> to vector<16x1xf32>
    %cst_17 = arith.constant 1.280000e+02 : f32
    %45 = vector.broadcast %cst_17 : f32 to vector<16x1xf32>
    %46 = arith.divf %44, %45 : vector<16x1xf32>
    %47 = arith.mulf %40, %40 : vector<16x128xf32>
    %cst_18 = arith.constant dense<0.000000e+00> : vector<16xf32>
    %48 = vector.multi_reduction <add>, %47, %cst_18 [1] : vector<16x128xf32> to vector<16xf32>
    %49 = vector.shape_cast %48 : vector<16xf32> to vector<16x1xf32>
    %cst_19 = arith.constant 1.280000e+02 : f32
    %50 = vector.broadcast %cst_19 : f32 to vector<16x1xf32>
    %51 = arith.divf %49, %50 : vector<16x1xf32>
    %52 = arith.mulf %46, %46 : vector<16x1xf32>
    %53 = arith.subf %51, %52 : vector<16x1xf32>
    %54 = vector.broadcast %46 : vector<16x1xf32> to vector<16x128xf32>
    %55 = arith.subf %40, %54 : vector<16x128xf32>
    %cst_20 = arith.constant 9.99999974E-6 : f32
    %56 = vector.broadcast %cst_20 : f32 to vector<16x1xf32>
    %57 = arith.addf %53, %56 : vector<16x1xf32>
    %58 = math.rsqrt %57 : vector<16x1xf32>
    %59 = vector.broadcast %58 : vector<16x1xf32> to vector<16x128xf32>
    %60 = arith.mulf %55, %59 : vector<16x128xf32>
    %61 = vector.broadcast %41 : vector<1x128xf32> to vector<16x128xf32>
    %62 = arith.mulf %60, %61 : vector<16x128xf32>
    %63 = vector.broadcast %42 : vector<1x128xf32> to vector<16x128xf32>
    %64 = arith.addf %62, %63 : vector<16x128xf32>
    %c1 = arith.constant 1 : index
    %c0_21 = arith.constant 0 : index
    %c0_22 = arith.constant 0 : index
    %65 = vector.load %arg3[%c1, %c0_21, %c0_22] : memref<4x128x128xf32, #tpu.memory_space<vmem>>, vector<1x128x128xf32>
    %66 = vector.shape_cast %65 : vector<1x128x128xf32> to vector<128x128xf32>
    %cst_23 = arith.constant dense<0.000000e+00> : vector<16x128xf32>
    %67 = tpu.matmul %64, %66, %cst_23 {dimension_numbers = #tpu.dot_dimension_numbers<[1], [0], [0], [1], [0, 0, 1, 1], [], []>} : vector<16x128xf32>, vector<128x128xf32>, vector<16x128xf32> -> vector<16x128xf32>
    %68 = vector.extract_strided_slice %1 {offsets = [6, 0], sizes = [1, 128], strides = [1, 1]} : vector<16x128xf32> to vector<1x128xf32>
    %69 = vector.broadcast %68 : vector<1x128xf32> to vector<16x128xf32>
    %70 = arith.addf %67, %69 : vector<16x128xf32>
    %cst_24 = arith.constant 0.000000e+00 : f32
    %71 = vector.broadcast %cst_24 : f32 to vector<16x128xf32>
    %72 = arith.maximumf %70, %71 : vector<16x128xf32>
    %73 = vector.extract_strided_slice %1 {offsets = [7, 0], sizes = [1, 128], strides = [1, 1]} : vector<16x128xf32> to vector<1x128xf32>
    %74 = vector.extract_strided_slice %1 {offsets = [8, 0], sizes = [1, 128], strides = [1, 1]} : vector<16x128xf32> to vector<1x128xf32>
    %cst_25 = arith.constant dense<0.000000e+00> : vector<16xf32>
    %75 = vector.multi_reduction <add>, %72, %cst_25 [1] : vector<16x128xf32> to vector<16xf32>
    %76 = vector.shape_cast %75 : vector<16xf32> to vector<16x1xf32>
    %cst_26 = arith.constant 1.280000e+02 : f32
    %77 = vector.broadcast %cst_26 : f32 to vector<16x1xf32>
    %78 = arith.divf %76, %77 : vector<16x1xf32>
    %79 = arith.mulf %72, %72 : vector<16x128xf32>
    %cst_27 = arith.constant dense<0.000000e+00> : vector<16xf32>
    %80 = vector.multi_reduction <add>, %79, %cst_27 [1] : vector<16x128xf32> to vector<16xf32>
    %81 = vector.shape_cast %80 : vector<16xf32> to vector<16x1xf32>
    %cst_28 = arith.constant 1.280000e+02 : f32
    %82 = vector.broadcast %cst_28 : f32 to vector<16x1xf32>
    %83 = arith.divf %81, %82 : vector<16x1xf32>
    %84 = arith.mulf %78, %78 : vector<16x1xf32>
    %85 = arith.subf %83, %84 : vector<16x1xf32>
    %86 = vector.broadcast %78 : vector<16x1xf32> to vector<16x128xf32>
    %87 = arith.subf %72, %86 : vector<16x128xf32>
    %cst_29 = arith.constant 9.99999974E-6 : f32
    %88 = vector.broadcast %cst_29 : f32 to vector<16x1xf32>
    %89 = arith.addf %85, %88 : vector<16x1xf32>
    %90 = math.rsqrt %89 : vector<16x1xf32>
    %91 = vector.broadcast %90 : vector<16x1xf32> to vector<16x128xf32>
    %92 = arith.mulf %87, %91 : vector<16x128xf32>
    %93 = vector.broadcast %73 : vector<1x128xf32> to vector<16x128xf32>
    %94 = arith.mulf %92, %93 : vector<16x128xf32>
    %95 = vector.broadcast %74 : vector<1x128xf32> to vector<16x128xf32>
    %96 = arith.addf %94, %95 : vector<16x128xf32>
    %97 = arith.addf %96, %32 : vector<16x128xf32>
    %c2 = arith.constant 2 : index
    %c0_30 = arith.constant 0 : index
    %c0_31 = arith.constant 0 : index
    %98 = vector.load %arg3[%c2, %c0_30, %c0_31] : memref<4x128x128xf32, #tpu.memory_space<vmem>>, vector<1x128x128xf32>
    %99 = vector.shape_cast %98 : vector<1x128x128xf32> to vector<128x128xf32>
    %cst_32 = arith.constant dense<0.000000e+00> : vector<16x128xf32>
    %100 = tpu.matmul %97, %99, %cst_32 {dimension_numbers = #tpu.dot_dimension_numbers<[1], [0], [0], [1], [0, 0, 1, 1], [], []>} : vector<16x128xf32>, vector<128x128xf32>, vector<16x128xf32> -> vector<16x128xf32>
    %101 = vector.extract_strided_slice %1 {offsets = [9, 0], sizes = [1, 128], strides = [1, 1]} : vector<16x128xf32> to vector<1x128xf32>
    %102 = vector.broadcast %101 : vector<1x128xf32> to vector<16x128xf32>
    %103 = arith.addf %100, %102 : vector<16x128xf32>
    %cst_33 = arith.constant 0.000000e+00 : f32
    %104 = vector.broadcast %cst_33 : f32 to vector<16x128xf32>
    %105 = arith.maximumf %103, %104 : vector<16x128xf32>
    %106 = vector.extract_strided_slice %1 {offsets = [10, 0], sizes = [1, 128], strides = [1, 1]} : vector<16x128xf32> to vector<1x128xf32>
    %107 = vector.extract_strided_slice %1 {offsets = [11, 0], sizes = [1, 128], strides = [1, 1]} : vector<16x128xf32> to vector<1x128xf32>
    %cst_34 = arith.constant dense<0.000000e+00> : vector<16xf32>
    %108 = vector.multi_reduction <add>, %105, %cst_34 [1] : vector<16x128xf32> to vector<16xf32>
    %109 = vector.shape_cast %108 : vector<16xf32> to vector<16x1xf32>
    %cst_35 = arith.constant 1.280000e+02 : f32
    %110 = vector.broadcast %cst_35 : f32 to vector<16x1xf32>
    %111 = arith.divf %109, %110 : vector<16x1xf32>
    %112 = arith.mulf %105, %105 : vector<16x128xf32>
    %cst_36 = arith.constant dense<0.000000e+00> : vector<16xf32>
    %113 = vector.multi_reduction <add>, %112, %cst_36 [1] : vector<16x128xf32> to vector<16xf32>
    %114 = vector.shape_cast %113 : vector<16xf32> to vector<16x1xf32>
    %cst_37 = arith.constant 1.280000e+02 : f32
    %115 = vector.broadcast %cst_37 : f32 to vector<16x1xf32>
    %116 = arith.divf %114, %115 : vector<16x1xf32>
    %117 = arith.mulf %111, %111 : vector<16x1xf32>
    %118 = arith.subf %116, %117 : vector<16x1xf32>
    %119 = vector.broadcast %111 : vector<16x1xf32> to vector<16x128xf32>
    %120 = arith.subf %105, %119 : vector<16x128xf32>
    %cst_38 = arith.constant 9.99999974E-6 : f32
    %121 = vector.broadcast %cst_38 : f32 to vector<16x1xf32>
    %122 = arith.addf %118, %121 : vector<16x1xf32>
    %123 = math.rsqrt %122 : vector<16x1xf32>
    %124 = vector.broadcast %123 : vector<16x1xf32> to vector<16x128xf32>
    %125 = arith.mulf %120, %124 : vector<16x128xf32>
    %126 = vector.broadcast %106 : vector<1x128xf32> to vector<16x128xf32>
    %127 = arith.mulf %125, %126 : vector<16x128xf32>
    %128 = vector.broadcast %107 : vector<1x128xf32> to vector<16x128xf32>
    %129 = arith.addf %127, %128 : vector<16x128xf32>
    %c3 = arith.constant 3 : index
    %c0_39 = arith.constant 0 : index
    %c0_40 = arith.constant 0 : index
    %130 = vector.load %arg3[%c3, %c0_39, %c0_40] : memref<4x128x128xf32, #tpu.memory_space<vmem>>, vector<1x128x128xf32>
    %131 = vector.shape_cast %130 : vector<1x128x128xf32> to vector<128x128xf32>
    %cst_41 = arith.constant dense<0.000000e+00> : vector<16x128xf32>
    %132 = tpu.matmul %129, %131, %cst_41 {dimension_numbers = #tpu.dot_dimension_numbers<[1], [0], [0], [1], [0, 0, 1, 1], [], []>} : vector<16x128xf32>, vector<128x128xf32>, vector<16x128xf32> -> vector<16x128xf32>
    %133 = vector.extract_strided_slice %1 {offsets = [12, 0], sizes = [1, 128], strides = [1, 1]} : vector<16x128xf32> to vector<1x128xf32>
    %134 = vector.broadcast %133 : vector<1x128xf32> to vector<16x128xf32>
    %135 = arith.addf %132, %134 : vector<16x128xf32>
    %cst_42 = arith.constant 0.000000e+00 : f32
    %136 = vector.broadcast %cst_42 : f32 to vector<16x128xf32>
    %137 = arith.maximumf %135, %136 : vector<16x128xf32>
    %138 = vector.extract_strided_slice %1 {offsets = [13, 0], sizes = [1, 128], strides = [1, 1]} : vector<16x128xf32> to vector<1x128xf32>
    %139 = vector.extract_strided_slice %1 {offsets = [14, 0], sizes = [1, 128], strides = [1, 1]} : vector<16x128xf32> to vector<1x128xf32>
    %cst_43 = arith.constant dense<0.000000e+00> : vector<16xf32>
    %140 = vector.multi_reduction <add>, %137, %cst_43 [1] : vector<16x128xf32> to vector<16xf32>
    %141 = vector.shape_cast %140 : vector<16xf32> to vector<16x1xf32>
    %cst_44 = arith.constant 1.280000e+02 : f32
    %142 = vector.broadcast %cst_44 : f32 to vector<16x1xf32>
    %143 = arith.divf %141, %142 : vector<16x1xf32>
    %144 = arith.mulf %137, %137 : vector<16x128xf32>
    %cst_45 = arith.constant dense<0.000000e+00> : vector<16xf32>
    %145 = vector.multi_reduction <add>, %144, %cst_45 [1] : vector<16x128xf32> to vector<16xf32>
    %146 = vector.shape_cast %145 : vector<16xf32> to vector<16x1xf32>
    %cst_46 = arith.constant 1.280000e+02 : f32
    %147 = vector.broadcast %cst_46 : f32 to vector<16x1xf32>
    %148 = arith.divf %146, %147 : vector<16x1xf32>
    %149 = arith.mulf %143, %143 : vector<16x1xf32>
    %150 = arith.subf %148, %149 : vector<16x1xf32>
    %151 = vector.broadcast %143 : vector<16x1xf32> to vector<16x128xf32>
    %152 = arith.subf %137, %151 : vector<16x128xf32>
    %cst_47 = arith.constant 9.99999974E-6 : f32
    %153 = vector.broadcast %cst_47 : f32 to vector<16x1xf32>
    %154 = arith.addf %150, %153 : vector<16x1xf32>
    %155 = math.rsqrt %154 : vector<16x1xf32>
    %156 = vector.broadcast %155 : vector<16x1xf32> to vector<16x128xf32>
    %157 = arith.mulf %152, %156 : vector<16x128xf32>
    %158 = vector.broadcast %138 : vector<1x128xf32> to vector<16x128xf32>
    %159 = arith.mulf %157, %158 : vector<16x128xf32>
    %160 = vector.broadcast %139 : vector<1x128xf32> to vector<16x128xf32>
    %161 = arith.addf %159, %160 : vector<16x128xf32>
    %162 = arith.addf %161, %97 : vector<16x128xf32>
    %c0_48 = arith.constant 0 : index
    %c0_49 = arith.constant 0 : index
    %163 = vector.load %arg5[%c0_48, %c0_49] : memref<16x128xf32, #tpu.memory_space<vmem>>, vector<16x128xf32>
    tpu.vector_store %arg5[%c0_48, %c0_49], %162 {strides = array<i32>} : memref<16x128xf32, #tpu.memory_space<vmem>>, vector<16x128xf32>,
    return
  }
  func.func @transform_0(%arg0: i32) -> (i32, i32) {
    %c0_i32 = arith.constant 0 : i32
    %c0_i32_0 = arith.constant 0 : i32
    return %arg0, %c0_i32 : i32, i32
  }
  func.func @transform_1(%arg0: i32) -> (i32, i32) {
    %c0_i32 = arith.constant 0 : i32
    %c0_i32_0 = arith.constant 0 : i32
    %c0_i32_1 = arith.constant 0 : i32
    return %c0_i32, %c0_i32_0 : i32, i32
  }
  func.func @transform_2(%arg0: i32) -> (i32, i32, i32) {
    %c0_i32 = arith.constant 0 : i32
    %c0_i32_0 = arith.constant 0 : i32
    %c0_i32_1 = arith.constant 0 : i32
    %c0_i32_2 = arith.constant 0 : i32
    return %c0_i32, %c0_i32_0, %c0_i32_1 : i32, i32, i32
  }
  func.func @transform_3(%arg0: i32) -> (i32, i32) {
    %c0_i32 = arith.constant 0 : i32
    %c0_i32_0 = arith.constant 0 : i32
    %c0_i32_1 = arith.constant 0 : i32
    return %c0_i32, %c0_i32_0 : i32, i32
  }
  func.func @transform_4(%arg0: i32) -> (i32, i32) {
    %c0_i32 = arith.constant 0 : i32
    %c0_i32_0 = arith.constant 0 : i32
    return %arg0, %c0_i32 : i32, i32
  }
}

</mosaic_0001>

<llo_original>
// kernel: shared_layer_forward.1
$region0: #{shared_layer_forward.1}
  #allocation0 [shape = 'u32[]', space=smem, size = 0x4, offset = 0x4, fixed_abs, tag = 'smem constant byte address 0x4 - core index']
  #allocation1 [shape = 'u32[144,128]{1,0:T(1,128)}', space=vmem, size = 0x12000, scoped, tag = 'internal scratch']
  %s0 = inlined_call_operand.hbm [shape: f32[16,32], index: 0, kind: input, shape index: {}]
  %s1 = inlined_call_operand.hbm [shape: f32[32,128], index: 1, kind: input, shape index: {}]
  %s2 = inlined_call_operand.hbm [shape: f32[4,128,128], index: 2, kind: input, shape index: {}]
  %s3 = inlined_call_operand.hbm [shape: f32[16,128], index: 3, kind: input, shape index: {}]
  %s4 = inlined_call_operand.hbm [shape: f32[16,128], index: 4, kind: output, shape index: {}]
  %s5 = sld [smem:[#allocation0]]
  $region42: #{shared_layer_forward.1} parent=0
    _
  %s7 = ssub.s32 1, %s5
  %s8 = scalar_select 0, %s7, %s5
  $region1: #{shared_layer_forward.1} parent=0
    #allocation2 [shape = 'u8[8192]{0}', space=vmem, size = 0x2000, scoped, tag = 'input window, operand 0, single buffered']
    #allocation3 [shape = 's32[1]{0}', space=sflag, size = 0x4, scoped, tag = 'scoped memory for shared_layer_forward.1']
    #allocation4 [shape = 's32[1]{0}', space=sflag, size = 0x4, scoped, tag = 'scoped memory for shared_layer_forward.1']
    #allocation5 [shape = 'u8[16384]{0}', space=vmem, size = 0x4000, scoped, tag = 'input window, operand 1, single buffered']
    #allocation6 [shape = 's32[1]{0}', space=sflag, size = 0x4, scoped, tag = 'scoped memory for shared_layer_forward.1']
    #allocation7 [shape = 'u8[262144]{0}', space=vmem, size = 0x40000, scoped, tag = 'input window, operand 2, single buffered']
    #allocation8 [shape = 'u8[8192]{0}', space=vmem, size = 0x2000, scoped, tag = 'input window, operand 3, single buffered']
    #allocation9 [shape = 's32[1]{0}', space=sflag, size = 0x4, scoped, tag = 'scoped memory for shared_layer_forward.1']
    #allocation10 [shape = 'u8[8192]{0}', space=vmem, size = 0x2000, scoped, tag = 'output window, operand 0, single buffered']
    %9 = vsyncpa [#allocation3], 0
    %10 = vsyncpa [#allocation6], 0
    %11 = vsyncpa [#allocation9], 0
    %12 = vsyncpa [#allocation4], 0
    // Predicated region
    $region2: #{shared_layer_forward.1} parent=1 // pred_check
      _
    $region3: #{shared_layer_forward.1} parent=1 // pred_check_branch
      %14 = sbr.rel (0) target = $region5
    $region4: #{shared_layer_forward.1} parent=1 // pred_region
      %s16 = ssub.s32 256, 256
      %17 = vsyncadd [#allocation3], %s16
      %s18 = sshll.u32 [#allocation2], 4
      %s19 = int_to_ptr.vmem [resolvable:$true] %s18
      %24 = dma.hbm_to_vmem [thread:$0]  %s0, 256, %s19, [#allocation3], 128, 128, 8
    $region5: #{shared_layer_forward.1} parent=1 // pred_fallthru
      _
    // Predicated region
    $region6: #{shared_layer_forward.1} parent=1 // pred_check
      _
    $region7: #{shared_layer_forward.1} parent=1 // pred_check_branch
      %26 = sbr.rel (0) target = $region9
    $region8: #{shared_layer_forward.1} parent=1 // pred_region
      %s28 = ssub.s32 512, 512
      %29 = vsyncadd [#allocation6], %s28
      %s30 = sshll.u32 [#allocation5], 4
      %s31 = int_to_ptr.vmem [resolvable:$true] %s30
      %36 = dma.hbm_to_vmem [thread:$0]  %s1, 512, %s31, [#allocation6], 128, 128, 8
    $region9: #{shared_layer_forward.1} parent=1 // pred_fallthru
      _
    // Predicated region
    $region10: #{shared_layer_forward.1} parent=1 // pred_check
      _
    $region11: #{shared_layer_forward.1} parent=1 // pred_check_branch
      %38 = sbr.rel (0) target = $region13
    $region12: #{shared_layer_forward.1} parent=1 // pred_region
      %s40 = ssub.s32 8192, 8192
      %41 = vsyncadd [#allocation6], %s40
      %s42 = sshll.u32 [#allocation7], 4
      %s43 = int_to_ptr.vmem [resolvable:$true] %s42
      %48 = dma.hbm_to_vmem [thread:$0]  %s2, 8192, %s43, [#allocation6], 128, 128, 8
    $region13: #{shared_layer_forward.1} parent=1 // pred_fallthru
      _
    // Predicated region
    $region14: #{shared_layer_forward.1} parent=1 // pred_check
      _
    $region15: #{shared_layer_forward.1} parent=1 // pred_check_branch
      %50 = sbr.rel (0) target = $region17
    $region16: #{shared_layer_forward.1} parent=1 // pred_region
      %s52 = ssub.s32 256, 256
      %53 = vsyncadd [#allocation9], %s52
      %s54 = sshll.u32 [#allocation8], 4
      %s55 = int_to_ptr.vmem [resolvable:$true] %s54
      %60 = dma.hbm_to_vmem [thread:$0]  %s3, 256, %s55, [#allocation9], 128, 128, 8
    $region17: #{shared_layer_forward.1} parent=1 // pred_fallthru
      _
    // Predicated region
    $region18: #{shared_layer_forward.1} parent=1 // pred_check
      _
    $region19: #{shared_layer_forward.1} parent=1 // pred_check_branch
      %62 = sbr.rel (0) target = $region21
    $region20: #{shared_layer_forward.1} parent=1 // pred_region
      %63 = dma.done [#allocation3], 256
    $region21: #{shared_layer_forward.1} parent=1 // pred_fallthru
      _
    // Predicated region
    $region22: #{shared_layer_forward.1} parent=1 // pred_check
      _
    $region23: #{shared_layer_forward.1} parent=1 // pred_check_branch
      %65 = sbr.rel (0) target = $region25
    $region24: #{shared_layer_forward.1} parent=1 // pred_region
      %66 = dma.done [#allocation6], 512
    $region25: #{shared_layer_forward.1} parent=1 // pred_fallthru
      _
    // Predicated region
    $region26: #{shared_layer_forward.1} parent=1 // pred_check
      _
    $region27: #{shared_layer_forward.1} parent=1 // pred_check_branch
      %68 = sbr.rel (0) target = $region29
    $region28: #{shared_layer_forward.1} parent=1 // pred_region
      %69 = dma.done [#allocation6], 8192
    $region29: #{shared_layer_forward.1} parent=1 // pred_fallthru
      _
    // Predicated region
    $region30: #{shared_layer_forward.1} parent=1 // pred_check
      _
    $region31: #{shared_layer_forward.1} parent=1 // pred_check_branch
      %71 = sbr.rel (0) target = $region33
    $region32: #{shared_layer_forward.1} parent=1 // pred_region
      %72 = dma.done [#allocation9], 256
    $region33: #{shared_layer_forward.1} parent=1 // pred_fallthru
      _
    %v73 = vld [vmem:[#allocation2] sm:$0xff]
    %v74 = vld [vmem:[#allocation2 + $0x8] sm:$0xff]
    %v75 = vld [vmem:[#allocation8] sm:$0xff]
    %v76 = vld [vmem:[#allocation8 + $0x8] sm:$0xff]
    %v77 = vld [vmem:[#allocation5] sm:$0xff]
    %v78 = vld [vmem:[#allocation5 + $0x8] sm:$0xff]
    %v79 = vld [vmem:[#allocation5 + $0x10] sm:$0xff]
    %v80 = vld [vmem:[#allocation5 + $0x18] sm:$0xff]
    %v81 = vlaneseq
    %v82 = vshrl.u32 %v81, 7
    %v83 = vsub.s32 0, %v82
    %v84 = vrot.slane %v75, %v83
    %vm85 = vcmask 261120
    %v87 = vsel %vm85, %v73, 0
    %v90 = vsel %vm85, %v74, 0
    %92 = vmatprep.subr.mxu0 0.0
    %93 = vmatpush1.msra.mxu0 %v77
    %94 = vmatprep.subr.mxu0 0.0
    %95 = vmatpush1.msra.mxu0 %v78
    %96 = vmatprep.subr.mxu0 0.0
    %97 = vmatpush1.msra.mxu0 %v79
    %98 = vmatprep.subr.mxu0 0.0
    %99 = vmatpush1.msra.mxu0 %v80
    %100 = vmatprep.subr.mxu0 0.0
    %101 = vmatpush1.msra.mxu0 0.0
    %102 = vmatprep.subr.mxu0 0.0
    %103 = vmatpush1.msra.mxu0 0.0
    %104 = vmatprep.subr.mxu0 0.0
    %105 = vmatpush1.msra.mxu0 0.0
    %106 = vmatprep.subr.mxu0 0.0
    %107 = vmatpush1.msra.mxu0 0.0
    %108 = vmatprep.subr.mxu0 0.0
    %109 = vmatpush1.msra.mxu0 0.0
    %110 = vmatprep.subr.mxu0 0.0
    %111 = vmatpush1.msra.mxu0 0.0
    %112 = vmatprep.subr.mxu0 0.0
    %113 = vmatpush1.msra.mxu0 0.0
    %114 = vmatprep.subr.mxu0 0.0
    %115 = vmatpush1.msra.mxu0 0.0
    %116 = vmatprep.subr.mxu0 0.0
    %117 = vmatpush1.msra.mxu0 0.0
    %118 = vmatprep.subr.mxu0 0.0
    %119 = vmatpush1.msra.mxu0 0.0
    %120 = vmatprep.subr.mxu0 0.0
    %121 = vmatpush1.msra.mxu0 0.0
    %122 = vmatprep.subr.mxu0 0.0
    %123 = vmatpush1.msra.mxu0 0.0
    %124 = vmatprep.subr.mxu0 0.0
    %125 = vmatpush1.msra.mxu0 0.0
    %126 = vmatprep.subr.mxu0 0.0
    %127 = vmatpush1.msra.mxu0 0.0
    %128 = vmatprep.subr.mxu0 0.0
    %129 = vmatpush1.msra.mxu0 0.0
    %130 = vmatprep.subr.mxu0 0.0
    %131 = vmatpush1.msra.mxu0 0.0
    %132 = vmatprep.subr.mxu0 0.0
    %133 = vmatpush1.msra.mxu0 0.0
    %134 = vmatprep.subr.mxu0 0.0
    %135 = vmatpush1.msra.mxu0 0.0
    %136 = vmatprep.subr.mxu0 0.0
    %137 = vmatpush1.msra.mxu0 0.0
    %138 = vmatprep.subr.mxu0 0.0
    %139 = vmatpush1.msra.mxu0 0.0
    %140 = vmatprep.subr.mxu0 0.0
    %141 = vmatpush1.msra.mxu0 0.0
    %142 = vmatprep.subr.mxu0 0.0
    %143 = vmatpush1.msra.mxu0 0.0
    %144 = vmatprep.subr.mxu0 0.0
    %145 = vmatpush1.msra.mxu0 0.0
    %146 = vmatprep.subr.mxu0 0.0
    %147 = vmatpush1.msra.mxu0 0.0
    %148 = vmatprep.subr.mxu0 0.0
    %149 = vmatpush1.msra.mxu0 0.0
    %150 = vmatprep.subr.mxu0 0.0
    %151 = vmatpush1.msra.mxu0 0.0
    %152 = vmatprep.subr.mxu0 0.0
    %153 = vmatpush1.msra.mxu0 0.0
    %154 = vmatprep.subr.mxu0 0.0
    %155 = vmatpush1.msra.mxu0 0.0
    %156 = vmatprep.mubr.f32.mxu0 0.0
    %157 = vmatmul.mubr.f32.gmra.mrb[0].mxu0 %v87
    %v158 = vpop.f32.mrb[0].mxu0
    %v159 = vadd.f32 %v84, %v158
    %v160 = vpop.f32.mrb[0].mxu0
    %161 = vmatprep.mubr.f32.mxu0 0.0
    %162 = vmatmul.mubr.f32.gmra.mrb[0].mxu0 %v90
    %v163 = vpop.f32.mrb[0].mxu0
    %v164 = vadd.f32 %v84, %v163
    %v165 = vpop.f32.mrb[0].mxu0
    %166 = vdwg.mxu0
    %v167 = vmax.f32 %v159, 0.0
    %v168 = vmax.f32 %v164, 0.0
    %169 = vadd.xlane.f32.xlu0 %v167
    %v170 = vpop.xlane.xlu0 %169
    %171 = vadd.xlane.f32.xlu0 %v168
    %v172 = vpop.xlane.xlu0 %171
    %v173 = vrcp.pop 128.0
    %v174 = vmul.f32 %v170, %v173
    %v175 = vmul.f32 %v172, %v173
    %v176 = vmul.f32 %v167, %v167
    %v177 = vmul.f32 %v168, %v168
    %178 = vadd.xlane.f32.xlu0 %v176
    %v179 = vpop.xlane.xlu0 %178
    %180 = vadd.xlane.f32.xlu0 %v177
    %v181 = vpop.xlane.xlu0 %180
    %v182 = vmul.f32 %v179, %v173
    %v183 = vmul.f32 %v181, %v173
    %v184 = vmul.f32 %v174, %v174
    %v185 = vmul.f32 %v175, %v175
    %v186 = vsub.f32 %v182, %v184
    %v187 = vsub.f32 %v183, %v185
    %v188 = vsub.f32 %v167, %v174
    %v189 = vsub.f32 %v168, %v175
    %v190 = vadd.f32 %v186, 1e-05
    %v191 = vadd.f32 %v187, 1e-05
    %v192 = vrsqrt.pop %v190
    %v193 = vrsqrt.pop %v191
    %v194 = vmul.f32 %v188, %v192
    %v195 = vmul.f32 %v189, %v193
    %v196 = vlaneseq
    %v197 = vshrl.u32 %v196, 7
    %v198 = vsub.s32 1, %v197
    %v199 = vrot.slane %v75, %v198
    %v200 = vmul.f32 %v194, %v199
    %v201 = vmul.f32 %v195, %v199
    %v202 = vlaneseq
    %v203 = vshrl.u32 %v202, 7
    %v204 = vsub.s32 2, %v203
    %v205 = vrot.slane %v75, %v204
    %v206 = vadd.f32 %v200, %v205
    %v207 = vadd.f32 %v201, %v205
    %v208 = vld [vmem:[#allocation7] sm:$0xff]
    %v209 = vld [vmem:[#allocation7 + $0x8] sm:$0xff]
    %v210 = vld [vmem:[#allocation7 + $0x10] sm:$0xff]
    %v211 = vld [vmem:[#allocation7 + $0x18] sm:$0xff]
    %v212 = vld [vmem:[#allocation7 + $0x20] sm:$0xff]
    %v213 = vld [vmem:[#allocation7 + $0x28] sm:$0xff]
    %v214 = vld [vmem:[#allocation7 + $0x30] sm:$0xff]
    %v215 = vld [vmem:[#allocation7 + $0x38] sm:$0xff]
    %v216 = vld [vmem:[#allocation7 + $0x40] sm:$0xff]
    %v217 = vld [vmem:[#allocation7 + $0x48] sm:$0xff]
    %v218 = vld [vmem:[#allocation7 + $0x50] sm:$0xff]
    %v219 = vld [vmem:[#allocation7 + $0x58] sm:$0xff]
    %v220 = vld [vmem:[#allocation7 + $0x60] sm:$0xff]
    %v221 = vld [vmem:[#allocation7 + $0x68] sm:$0xff]
    %v222 = vld [vmem:[#allocation7 + $0x70] sm:$0xff]
    %v223 = vld [vmem:[#allocation7 + $0x78] sm:$0xff]
    %v224 = vlaneseq
    %v225 = vshrl.u32 %v224, 7
    %v226 = vsub.s32 3, %v225
    %v227 = vrot.slane %v75, %v226
    %228 = vmatprep.subr.mxu0 0.0
    %229 = vmatpush1.msra.mxu0 %v208
    %230 = vmatprep.subr.mxu0 0.0
    %231 = vmatpush1.msra.mxu0 %v209
    %232 = vmatprep.subr.mxu0 0.0
    %233 = vmatpush1.msra.mxu0 %v210
    %234 = vmatprep.subr.mxu0 0.0
    %235 = vmatpush1.msra.mxu0 %v211
    %236 = vmatprep.subr.mxu0 0.0
    %237 = vmatpush1.msra.mxu0 %v212
    %238 = vmatprep.subr.mxu0 0.0
    %239 = vmatpush1.msra.mxu0 %v213
    %240 = vmatprep.subr.mxu0 0.0
    %241 = vmatpush1.msra.mxu0 %v214
    %242 = vmatprep.subr.mxu0 0.0
    %243 = vmatpush1.msra.mxu0 %v215
    %244 = vmatprep.subr.mxu0 0.0
    %245 = vmatpush1.msra.mxu0 %v216
    %246 = vmatprep.subr.mxu0 0.0
    %247 = vmatpush1.msra.mxu0 %v217
    %248 = vmatprep.subr.mxu0 0.0
    %249 = vmatpush1.msra.mxu0 %v218
    %250 = vmatprep.subr.mxu0 0.0
    %251 = vmatpush1.msra.mxu0 %v219
    %252 = vmatprep.subr.mxu0 0.0
    %253 = vmatpush1.msra.mxu0 %v220
    %254 = vmatprep.subr.mxu0 0.0
    %255 = vmatpush1.msra.mxu0 %v221
    %256 = vmatprep.subr.mxu0 0.0
    %257 = vmatpush1.msra.mxu0 %v222
    %258 = vmatprep.subr.mxu0 0.0
    %259 = vmatpush1.msra.mxu0 %v223
    %260 = vmatprep.subr.mxu0 0.0
    %261 = vmatpush1.msra.mxu0 0.0
    %262 = vmatprep.subr.mxu0 0.0
    %263 = vmatpush1.msra.mxu0 0.0
    %264 = vmatprep.subr.mxu0 0.0
    %265 = vmatpush1.msra.mxu0 0.0
    %266 = vmatprep.subr.mxu0 0.0
    %267 = vmatpush1.msra.mxu0 0.0
    %268 = vmatprep.subr.mxu0 0.0
    %269 = vmatpush1.msra.mxu0 0.0
    %270 = vmatprep.subr.mxu0 0.0
    %271 = vmatpush1.msra.mxu0 0.0
    %272 = vmatprep.subr.mxu0 0.0
    %273 = vmatpush1.msra.mxu0 0.0
    %274 = vmatprep.subr.mxu0 0.0
    %275 = vmatpush1.msra.mxu0 0.0
    %276 = vmatprep.subr.mxu0 0.0
    %277 = vmatpush1.msra.mxu0 0.0
    %278 = vmatprep.subr.mxu0 0.0
    %279 = vmatpush1.msra.mxu0 0.0
    %280 = vmatprep.subr.mxu0 0.0
    %281 = vmatpush1.msra.mxu0 0.0
    %282 = vmatprep.subr.mxu0 0.0
    %283 = vmatpush1.msra.mxu0 0.0
    %284 = vmatprep.subr.mxu0 0.0
    %285 = vmatpush1.msra.mxu0 0.0
    %286 = vmatprep.subr.mxu0 0.0
    %287 = vmatpush1.msra.mxu0 0.0
    %288 = vmatprep.subr.mxu0 0.0
    %289 = vmatpush1.msra.mxu0 0.0
    %290 = vmatprep.subr.mxu0 0.0
    %291 = vmatpush1.msra.mxu0 0.0
    %292 = vmatprep.mubr.f32.mxu0 0.0
    %293 = vmatmul.mubr.f32.gmra.mrb[0].mxu0 %v206
    %v294 = vpop.f32.mrb[0].mxu0
    %v295 = vadd.f32 %v227, %v294
    %v296 = vpop.f32.mrb[0].mxu0
    %297 = vmatprep.mubr.f32.mxu0 0.0
    %298 = vmatmul.mubr.f32.gmra.mrb[0].mxu0 %v207
    %v299 = vpop.f32.mrb[0].mxu0
    %v300 = vadd.f32 %v227, %v299
    %v301 = vpop.f32.mrb[0].mxu0
    %302 = vdwg.mxu0
    %v303 = vmax.f32 %v295, 0.0
    %v304 = vmax.f32 %v300, 0.0
    %305 = vadd.xlane.f32.xlu0 %v303
    %v306 = vpop.xlane.xlu0 %305
    %307 = vadd.xlane.f32.xlu0 %v304
    %v308 = vpop.xlane.xlu0 %307
    %v309 = vmul.f32 %v306, %v173
    %v310 = vmul.f32 %v308, %v173
    %v311 = vmul.f32 %v303, %v303
    %v312 = vmul.f32 %v304, %v304
    %313 = vadd.xlane.f32.xlu0 %v311
    %v314 = vpop.xlane.xlu0 %313
    %315 = vadd.xlane.f32.xlu0 %v312
    %v316 = vpop.xlane.xlu0 %315
    %v317 = vmul.f32 %v314, %v173
    %v318 = vmul.f32 %v316, %v173
    %v319 = vmul.f32 %v309, %v309
    %v320 = vmul.f32 %v310, %v310
    %v321 = vsub.f32 %v317, %v319
    %v322 = vsub.f32 %v318, %v320
    %v323 = vsub.f32 %v303, %v309
    %v324 = vsub.f32 %v304, %v310
    %v325 = vadd.f32 %v321, 1e-05
    %v326 = vadd.f32 %v322, 1e-05
    %v327 = vrsqrt.pop %v325
    %v328 = vrsqrt.pop %v326
    %v329 = vmul.f32 %v323, %v327
    %v330 = vmul.f32 %v324, %v328
    %v331 = vlaneseq
    %v332 = vshrl.u32 %v331, 7
    %v333 = vsub.s32 4, %v332
    %v334 = vrot.slane %v75, %v333
    %v335 = vmul.f32 %v329, %v334
    %v336 = vmul.f32 %v330, %v334
    %v337 = vlaneseq
    %v338 = vshrl.u32 %v337, 7
    %v339 = vsub.s32 5, %v338
    %v340 = vrot.slane %v75, %v339
    %v341 = vadd.f32 %v335, %v340
    %v342 = vadd.f32 %v336, %v340
    %s343 = scalar_lea.vmem [#allocation7], 128
    %v344 = vld [vmem:[%s343] sm:$0xff]
    %v345 = vld [vmem:[%s343 + $0x8] sm:$0xff]
    %v346 = vld [vmem:[%s343 + $0x10] sm:$0xff]
    %v347 = vld [vmem:[%s343 + $0x18] sm:$0xff]
    %v348 = vld [vmem:[%s343 + $0x20] sm:$0xff]
    %v349 = vld [vmem:[%s343 + $0x28] sm:$0xff]
    %v350 = vld [vmem:[%s343 + $0x30] sm:$0xff]
    %v351 = vld [vmem:[%s343 + $0x38] sm:$0xff]
    %v352 = vld [vmem:[%s343 + $0x40] sm:$0xff]
    %v353 = vld [vmem:[%s343 + $0x48] sm:$0xff]
    %v354 = vld [vmem:[%s343 + $0x50] sm:$0xff]
    %v355 = vld [vmem:[%s343 + $0x58] sm:$0xff]
    %v356 = vld [vmem:[%s343 + $0x60] sm:$0xff]
    %v357 = vld [vmem:[%s343 + $0x68] sm:$0xff]
    %v358 = vld [vmem:[%s343 + $0x70] sm:$0xff]
    %v359 = vld [vmem:[%s343 + $0x78] sm:$0xff]
    %v360 = vlaneseq
    %v361 = vshrl.u32 %v360, 7
    %v362 = vsub.s32 6, %v361
    %v363 = vrot.slane %v75, %v362
    %364 = vmatprep.subr.mxu0 0.0
    %365 = vmatpush1.msra.mxu0 %v344
    %366 = vmatprep.subr.mxu0 0.0
    %367 = vmatpush1.msra.mxu0 %v345
    %368 = vmatprep.subr.mxu0 0.0
    %369 = vmatpush1.msra.mxu0 %v346
    %370 = vmatprep.subr.mxu0 0.0
    %371 = vmatpush1.msra.mxu0 %v347
    %372 = vmatprep.subr.mxu0 0.0
    %373 = vmatpush1.msra.mxu0 %v348
    %374 = vmatprep.subr.mxu0 0.0
    %375 = vmatpush1.msra.mxu0 %v349
    %376 = vmatprep.subr.mxu0 0.0
    %377 = vmatpush1.msra.mxu0 %v350
    %378 = vmatprep.subr.mxu0 0.0
    %379 = vmatpush1.msra.mxu0 %v351
    %380 = vmatprep.subr.mxu0 0.0
    %381 = vmatpush1.msra.mxu0 %v352
    %382 = vmatprep.subr.mxu0 0.0
    %383 = vmatpush1.msra.mxu0 %v353
    %384 = vmatprep.subr.mxu0 0.0
    %385 = vmatpush1.msra.mxu0 %v354
    %386 = vmatprep.subr.mxu0 0.0
    %387 = vmatpush1.msra.mxu0 %v355
    %388 = vmatprep.subr.mxu0 0.0
    %389 = vmatpush1.msra.mxu0 %v356
    %390 = vmatprep.subr.mxu0 0.0
    %391 = vmatpush1.msra.mxu0 %v357
    %392 = vmatprep.subr.mxu0 0.0
    %393 = vmatpush1.msra.mxu0 %v358
    %394 = vmatprep.subr.mxu0 0.0
    %395 = vmatpush1.msra.mxu0 %v359
    %396 = vmatprep.subr.mxu0 0.0
    %397 = vmatpush1.msra.mxu0 0.0
    %398 = vmatprep.subr.mxu0 0.0
    %399 = vmatpush1.msra.mxu0 0.0
    %400 = vmatprep.subr.mxu0 0.0
    %401 = vmatpush1.msra.mxu0 0.0
    %402 = vmatprep.subr.mxu0 0.0
    %403 = vmatpush1.msra.mxu0 0.0
    %404 = vmatprep.subr.mxu0 0.0
    %405 = vmatpush1.msra.mxu0 0.0
    %406 = vmatprep.subr.mxu0 0.0
    %407 = vmatpush1.msra.mxu0 0.0
    %408 = vmatprep.subr.mxu0 0.0
    %409 = vmatpush1.msra.mxu0 0.0
    %410 = vmatprep.subr.mxu0 0.0
    %411 = vmatpush1.msra.mxu0 0.0
    %412 = vmatprep.subr.mxu0 0.0
    %413 = vmatpush1.msra.mxu0 0.0
    %414 = vmatprep.subr.mxu0 0.0
    %415 = vmatpush1.msra.mxu0 0.0
    %416 = vmatprep.subr.mxu0 0.0
    %417 = vmatpush1.msra.mxu0 0.0
    %418 = vmatprep.subr.mxu0 0.0
    %419 = vmatpush1.msra.mxu0 0.0
    %420 = vmatprep.subr.mxu0 0.0
    %421 = vmatpush1.msra.mxu0 0.0
    %422 = vmatprep.subr.mxu0 0.0
    %423 = vmatpush1.msra.mxu0 0.0
    %424 = vmatprep.subr.mxu0 0.0
    %425 = vmatpush1.msra.mxu0 0.0
    %426 = vmatprep.subr.mxu0 0.0
    %427 = vmatpush1.msra.mxu0 0.0
    %428 = vmatprep.mubr.f32.mxu0 0.0
    %429 = vmatmul.mubr.f32.gmra.mrb[0].mxu0 %v341
    %v430 = vpop.f32.mrb[0].mxu0
    %v431 = vadd.f32 %v363, %v430
    %v432 = vpop.f32.mrb[0].mxu0
    %433 = vmatprep.mubr.f32.mxu0 0.0
    %434 = vmatmul.mubr.f32.gmra.mrb[0].mxu0 %v342
    %v435 = vpop.f32.mrb[0].mxu0
    %v436 = vadd.f32 %v363, %v435
    %v437 = vpop.f32.mrb[0].mxu0
    %438 = vdwg.mxu0
    %v439 = vmax.f32 %v431, 0.0
    %v440 = vmax.f32 %v436, 0.0
    %441 = vadd.xlane.f32.xlu0 %v439
    %v442 = vpop.xlane.xlu0 %441
    %443 = vadd.xlane.f32.xlu0 %v440
    %v444 = vpop.xlane.xlu0 %443
    %v445 = vmul.f32 %v442, %v173
    %v446 = vmul.f32 %v444, %v173
    %v447 = vmul.f32 %v439, %v439
    %v448 = vmul.f32 %v440, %v440
    %449 = vadd.xlane.f32.xlu0 %v447
    %v450 = vpop.xlane.xlu0 %449
    %451 = vadd.xlane.f32.xlu0 %v448
    %v452 = vpop.xlane.xlu0 %451
    %v453 = vmul.f32 %v450, %v173
    %v454 = vmul.f32 %v452, %v173
    %v455 = vmul.f32 %v445, %v445
    %v456 = vmul.f32 %v446, %v446
    %v457 = vsub.f32 %v453, %v455
    %v458 = vsub.f32 %v454, %v456
    %v459 = vsub.f32 %v439, %v445
    %v460 = vsub.f32 %v440, %v446
    %v461 = vadd.f32 %v457, 1e-05
    %v462 = vadd.f32 %v458, 1e-05
    %v463 = vrsqrt.pop %v461
    %v464 = vrsqrt.pop %v462
    %v465 = vmul.f32 %v459, %v463
    %v466 = vmul.f32 %v460, %v464
    %v467 = vlaneseq
    %v468 = vshrl.u32 %v467, 7
    %v469 = vsub.s32 7, %v468
    %v470 = vrot.slane %v75, %v469
    %v471 = vmul.f32 %v465, %v470
    %v472 = vmul.f32 %v466, %v470
    %v473 = vlaneseq
    %v474 = vshrl.u32 %v473, 7
    %v475 = vsub.s32 0, %v474
    %v476 = vrot.slane %v76, %v475
    %v477 = vadd.f32 %v471, %v476
    %v478 = vadd.f32 %v472, %v476
    %v479 = vadd.f32 %v477, %v206
    %v480 = vadd.f32 %v478, %v207
    %s481 = scalar_lea.vmem [#allocation7], 256
    %v482 = vld [vmem:[%s481] sm:$0xff]
    %v483 = vld [vmem:[%s481 + $0x8] sm:$0xff]
    %v484 = vld [vmem:[%s481 + $0x10] sm:$0xff]
    %v485 = vld [vmem:[%s481 + $0x18] sm:$0xff]
    %v486 = vld [vmem:[%s481 + $0x20] sm:$0xff]
    %v487 = vld [vmem:[%s481 + $0x28] sm:$0xff]
    %v488 = vld [vmem:[%s481 + $0x30] sm:$0xff]
    %v489 = vld [vmem:[%s481 + $0x38] sm:$0xff]
    %v490 = vld [vmem:[%s481 + $0x40] sm:$0xff]
    %v491 = vld [vmem:[%s481 + $0x48] sm:$0xff]
    %v492 = vld [vmem:[%s481 + $0x50] sm:$0xff]
    %v493 = vld [vmem:[%s481 + $0x58] sm:$0xff]
    %v494 = vld [vmem:[%s481 + $0x60] sm:$0xff]
    %v495 = vld [vmem:[%s481 + $0x68] sm:$0xff]
    %v496 = vld [vmem:[%s481 + $0x70] sm:$0xff]
    %v497 = vld [vmem:[%s481 + $0x78] sm:$0xff]
    %v498 = vlaneseq
    %v499 = vshrl.u32 %v498, 7
    %v500 = vsub.s32 1, %v499
    %v501 = vrot.slane %v76, %v500
    %502 = vmatprep.subr.mxu0 0.0
    %503 = vmatpush1.msra.mxu0 %v482
    %504 = vmatprep.subr.mxu0 0.0
    %505 = vmatpush1.msra.mxu0 %v483
    %506 = vmatprep.subr.mxu0 0.0
    %507 = vmatpush1.msra.mxu0 %v484
    %508 = vmatprep.subr.mxu0 0.0
    %509 = vmatpush1.msra.mxu0 %v485
    %510 = vmatprep.subr.mxu0 0.0
    %511 = vmatpush1.msra.mxu0 %v486
    %512 = vmatprep.subr.mxu0 0.0
    %513 = vmatpush1.msra.mxu0 %v487
    %514 = vmatprep.subr.mxu0 0.0
    %515 = vmatpush1.msra.mxu0 %v488
    %516 = vmatprep.subr.mxu0 0.0
    %517 = vmatpush1.msra.mxu0 %v489
    %518 = vmatprep.subr.mxu0 0.0
    %519 = vmatpush1.msra.mxu0 %v490
    %520 = vmatprep.subr.mxu0 0.0
    %521 = vmatpush1.msra.mxu0 %v491
    %522 = vmatprep.subr.mxu0 0.0
    %523 = vmatpush1.msra.mxu0 %v492
    %524 = vmatprep.subr.mxu0 0.0
    %525 = vmatpush1.msra.mxu0 %v493
    %526 = vmatprep.subr.mxu0 0.0
    %527 = vmatpush1.msra.mxu0 %v494
    %528 = vmatprep.subr.mxu0 0.0
    %529 = vmatpush1.msra.mxu0 %v495
    %530 = vmatprep.subr.mxu0 0.0
    %531 = vmatpush1.msra.mxu0 %v496
    %532 = vmatprep.subr.mxu0 0.0
    %533 = vmatpush1.msra.mxu0 %v497
    %534 = vmatprep.subr.mxu0 0.0
    %535 = vmatpush1.msra.mxu0 0.0
    %536 = vmatprep.subr.mxu0 0.0
    %537 = vmatpush1.msra.mxu0 0.0
    %538 = vmatprep.subr.mxu0 0.0
    %539 = vmatpush1.msra.mxu0 0.0
    %540 = vmatprep.subr.mxu0 0.0
    %541 = vmatpush1.msra.mxu0 0.0
    %542 = vmatprep.subr.mxu0 0.0
    %543 = vmatpush1.msra.mxu0 0.0
    %544 = vmatprep.subr.mxu0 0.0
    %545 = vmatpush1.msra.mxu0 0.0
    %546 = vmatprep.subr.mxu0 0.0
    %547 = vmatpush1.msra.mxu0 0.0
    %548 = vmatprep.subr.mxu0 0.0
    %549 = vmatpush1.msra.mxu0 0.0
    %550 = vmatprep.subr.mxu0 0.0
    %551 = vmatpush1.msra.mxu0 0.0
    %552 = vmatprep.subr.mxu0 0.0
    %553 = vmatpush1.msra.mxu0 0.0
    %554 = vmatprep.subr.mxu0 0.0
    %555 = vmatpush1.msra.mxu0 0.0
    %556 = vmatprep.subr.mxu0 0.0
    %557 = vmatpush1.msra.mxu0 0.0
    %558 = vmatprep.subr.mxu0 0.0
    %559 = vmatpush1.msra.mxu0 0.0
    %560 = vmatprep.subr.mxu0 0.0
    %561 = vmatpush1.msra.mxu0 0.0
    %562 = vmatprep.subr.mxu0 0.0
    %563 = vmatpush1.msra.mxu0 0.0
    %564 = vmatprep.subr.mxu0 0.0
    %565 = vmatpush1.msra.mxu0 0.0
    %566 = vmatprep.mubr.f32.mxu0 0.0
    %567 = vmatmul.mubr.f32.gmra.mrb[0].mxu0 %v479
    %v568 = vpop.f32.mrb[0].mxu0
    %v569 = vadd.f32 %v501, %v568
    %v570 = vpop.f32.mrb[0].mxu0
    %571 = vmatprep.mubr.f32.mxu0 0.0
    %572 = vmatmul.mubr.f32.gmra.mrb[0].mxu0 %v480
    %v573 = vpop.f32.mrb[0].mxu0
    %v574 = vadd.f32 %v501, %v573
    %v575 = vpop.f32.mrb[0].mxu0
    %576 = vdwg.mxu0
    %v577 = vmax.f32 %v569, 0.0
    %v578 = vmax.f32 %v574, 0.0
    %579 = vadd.xlane.f32.xlu0 %v577
    %v580 = vpop.xlane.xlu0 %579
    %581 = vadd.xlane.f32.xlu0 %v578
    %v582 = vpop.xlane.xlu0 %581
    %v583 = vmul.f32 %v580, %v173
    %v584 = vmul.f32 %v582, %v173
    %v585 = vmul.f32 %v577, %v577
    %v586 = vmul.f32 %v578, %v578
    %587 = vadd.xlane.f32.xlu0 %v585
    %v588 = vpop.xlane.xlu0 %587
    %589 = vadd.xlane.f32.xlu0 %v586
    %v590 = vpop.xlane.xlu0 %589
    %v591 = vmul.f32 %v588, %v173
    %v592 = vmul.f32 %v590, %v173
    %v593 = vmul.f32 %v583, %v583
    %v594 = vmul.f32 %v584, %v584
    %v595 = vsub.f32 %v591, %v593
    %v596 = vsub.f32 %v592, %v594
    %v597 = vsub.f32 %v577, %v583
    %v598 = vsub.f32 %v578, %v584
    %v599 = vadd.f32 %v595, 1e-05
    %v600 = vadd.f32 %v596, 1e-05
    %v601 = vrsqrt.pop %v599
    %v602 = vrsqrt.pop %v600
    %v603 = vmul.f32 %v597, %v601
    %v604 = vmul.f32 %v598, %v602
    %v605 = vlaneseq
    %v606 = vshrl.u32 %v605, 7
    %v607 = vsub.s32 2, %v606
    %v608 = vrot.slane %v76, %v607
    %v609 = vmul.f32 %v603, %v608
    %v610 = vmul.f32 %v604, %v608
    %v611 = vlaneseq
    %v612 = vshrl.u32 %v611, 7
    %v613 = vsub.s32 3, %v612
    %v614 = vrot.slane %v76, %v613
    %v615 = vadd.f32 %v609, %v614
    %v616 = vadd.f32 %v610, %v614
    %s617 = scalar_lea.vmem [#allocation7], 384
    %v618 = vld [vmem:[%s617] sm:$0xff]
    %v619 = vld [vmem:[%s617 + $0x8] sm:$0xff]
    %v620 = vld [vmem:[%s617 + $0x10] sm:$0xff]
    %v621 = vld [vmem:[%s617 + $0x18] sm:$0xff]
    %v622 = vld [vmem:[%s617 + $0x20] sm:$0xff]
    %v623 = vld [vmem:[%s617 + $0x28] sm:$0xff]
    %v624 = vld [vmem:[%s617 + $0x30] sm:$0xff]
    %v625 = vld [vmem:[%s617 + $0x38] sm:$0xff]
    %v626 = vld [vmem:[%s617 + $0x40] sm:$0xff]
    %v627 = vld [vmem:[%s617 + $0x48] sm:$0xff]
    %v628 = vld [vmem:[%s617 + $0x50] sm:$0xff]
    %v629 = vld [vmem:[%s617 + $0x58] sm:$0xff]
    %v630 = vld [vmem:[%s617 + $0x60] sm:$0xff]
    %v631 = vld [vmem:[%s617 + $0x68] sm:$0xff]
    %v632 = vld [vmem:[%s617 + $0x70] sm:$0xff]
    %v633 = vld [vmem:[%s617 + $0x78] sm:$0xff]
    %v634 = vlaneseq
    %v635 = vshrl.u32 %v634, 7
    %v636 = vsub.s32 4, %v635
    %v637 = vrot.slane %v76, %v636
    %638 = vmatprep.subr.mxu0 0.0
    %639 = vmatpush1.msra.mxu0 %v618
    %640 = vmatprep.subr.mxu0 0.0
    %641 = vmatpush1.msra.mxu0 %v619
    %642 = vmatprep.subr.mxu0 0.0
    %643 = vmatpush1.msra.mxu0 %v620
    %644 = vmatprep.subr.mxu0 0.0
    %645 = vmatpush1.msra.mxu0 %v621
    %646 = vmatprep.subr.mxu0 0.0
    %647 = vmatpush1.msra.mxu0 %v622
    %648 = vmatprep.subr.mxu0 0.0
    %649 = vmatpush1.msra.mxu0 %v623
    %650 = vmatprep.subr.mxu0 0.0
    %651 = vmatpush1.msra.mxu0 %v624
    %652 = vmatprep.subr.mxu0 0.0
    %653 = vmatpush1.msra.mxu0 %v625
    %654 = vmatprep.subr.mxu0 0.0
    %655 = vmatpush1.msra.mxu0 %v626
    %656 = vmatprep.subr.mxu0 0.0
    %657 = vmatpush1.msra.mxu0 %v627
    %658 = vmatprep.subr.mxu0 0.0
    %659 = vmatpush1.msra.mxu0 %v628
    %660 = vmatprep.subr.mxu0 0.0
    %661 = vmatpush1.msra.mxu0 %v629
    %662 = vmatprep.subr.mxu0 0.0
    %663 = vmatpush1.msra.mxu0 %v630
    %664 = vmatprep.subr.mxu0 0.0
    %665 = vmatpush1.msra.mxu0 %v631
    %666 = vmatprep.subr.mxu0 0.0
    %667 = vmatpush1.msra.mxu0 %v632
    %668 = vmatprep.subr.mxu0 0.0
    %669 = vmatpush1.msra.mxu0 %v633
    %670 = vmatprep.subr.mxu0 0.0
    %671 = vmatpush1.msra.mxu0 0.0
    %672 = vmatprep.subr.mxu0 0.0
    %673 = vmatpush1.msra.mxu0 0.0
    %674 = vmatprep.subr.mxu0 0.0
    %675 = vmatpush1.msra.mxu0 0.0
    %676 = vmatprep.subr.mxu0 0.0
    %677 = vmatpush1.msra.mxu0 0.0
    %678 = vmatprep.subr.mxu0 0.0
    %679 = vmatpush1.msra.mxu0 0.0
    %680 = vmatprep.subr.mxu0 0.0
    %681 = vmatpush1.msra.mxu0 0.0
    %682 = vmatprep.subr.mxu0 0.0
    %683 = vmatpush1.msra.mxu0 0.0
    %684 = vmatprep.subr.mxu0 0.0
    %685 = vmatpush1.msra.mxu0 0.0
    %686 = vmatprep.subr.mxu0 0.0
    %687 = vmatpush1.msra.mxu0 0.0
    %688 = vmatprep.subr.mxu0 0.0
    %689 = vmatpush1.msra.mxu0 0.0
    %690 = vmatprep.subr.mxu0 0.0
    %691 = vmatpush1.msra.mxu0 0.0
    %692 = vmatprep.subr.mxu0 0.0
    %693 = vmatpush1.msra.mxu0 0.0
    %694 = vmatprep.subr.mxu0 0.0
    %695 = vmatpush1.msra.mxu0 0.0
    %696 = vmatprep.subr.mxu0 0.0
    %697 = vmatpush1.msra.mxu0 0.0
    %698 = vmatprep.subr.mxu0 0.0
    %699 = vmatpush1.msra.mxu0 0.0
    %700 = vmatprep.subr.mxu0 0.0
    %701 = vmatpush1.msra.mxu0 0.0
    %702 = vmatprep.mubr.f32.mxu0 0.0
    %703 = vmatmul.mubr.f32.gmra.mrb[0].mxu0 %v615
    %v704 = vpop.f32.mrb[0].mxu0
    %v705 = vadd.f32 %v637, %v704
    %v706 = vpop.f32.mrb[0].mxu0
    %707 = vmatprep.mubr.f32.mxu0 0.0
    %708 = vmatmul.mubr.f32.gmra.mrb[0].mxu0 %v616
    %v709 = vpop.f32.mrb[0].mxu0
    %v710 = vadd.f32 %v637, %v709
    %v711 = vpop.f32.mrb[0].mxu0
    %712 = vdwg.mxu0
    %v713 = vmax.f32 %v705, 0.0
    %v714 = vmax.f32 %v710, 0.0
    %715 = vadd.xlane.f32.xlu0 %v713
    %v716 = vpop.xlane.xlu0 %715
    %717 = vadd.xlane.f32.xlu0 %v714
    %v718 = vpop.xlane.xlu0 %717
    %v719 = vmul.f32 %v716, %v173
    %v720 = vmul.f32 %v718, %v173
    %v721 = vmul.f32 %v713, %v713
    %v722 = vmul.f32 %v714, %v714
    %723 = vadd.xlane.f32.xlu0 %v721
    %v724 = vpop.xlane.xlu0 %723
    %725 = vadd.xlane.f32.xlu0 %v722
    %v726 = vpop.xlane.xlu0 %725
    %v727 = vmul.f32 %v724, %v173
    %v728 = vmul.f32 %v726, %v173
    %v729 = vmul.f32 %v719, %v719
    %v730 = vmul.f32 %v720, %v720
    %v731 = vsub.f32 %v727, %v729
    %v732 = vsub.f32 %v728, %v730
    %v733 = vsub.f32 %v713, %v719
    %v734 = vsub.f32 %v714, %v720
    %v735 = vadd.f32 %v731, 1e-05
    %v736 = vadd.f32 %v732, 1e-05
    %v737 = vrsqrt.pop %v735
    %v738 = vrsqrt.pop %v736
    %v739 = vmul.f32 %v733, %v737
    %v740 = vmul.f32 %v734, %v738
    %v741 = vlaneseq
    %v742 = vshrl.u32 %v741, 7
    %v743 = vsub.s32 5, %v742
    %v744 = vrot.slane %v76, %v743
    %v745 = vmul.f32 %v739, %v744
    %v746 = vmul.f32 %v740, %v744
    %v747 = vlaneseq
    %v748 = vshrl.u32 %v747, 7
    %v749 = vsub.s32 6, %v748
    %v750 = vrot.slane %v76, %v749
    %v751 = vadd.f32 %v745, %v750
    %v752 = vadd.f32 %v746, %v750
    %v753 = vadd.f32 %v751, %v479
    %v754 = vadd.f32 %v752, %v480
    %755 = vst [vmem:[#allocation10] sm:$0xff] %v753
    %756 = vst [vmem:[#allocation10 + $0x8] sm:$0xff] %v754
    // Predicated region
    $region34: #{shared_layer_forward.1} parent=1 // pred_check
      _
    $region35: #{shared_layer_forward.1} parent=1 // pred_check_branch
      %758 = sbr.rel (0) target = $region37
    $region36: #{shared_layer_forward.1} parent=1 // pred_region
      %s760 = ssub.s32 256, 256
      %761 = vsyncadd [#allocation4], %s760
      %s762 = sshll.u32 [#allocation10], 4
      %s763 = int_to_ptr.vmem [resolvable:$true] %s762
      %768 = dma.vmem_to_hbm [thread:$0]  %s763, 256, %s4, [#allocation4], 128, 128, 8
    $region37: #{shared_layer_forward.1} parent=1 // pred_fallthru
      _
    // Predicated region
    $region38: #{shared_layer_forward.1} parent=1 // pred_check
      _
    $region39: #{shared_layer_forward.1} parent=1 // pred_check_branch
      %770 = sbr.rel (0) target = $region41
    $region40: #{shared_layer_forward.1} parent=1 // pred_region
      %771 = dma.done [#allocation4], 256
    $region41: #{shared_layer_forward.1} parent=1 // pred_fallthru
      _
    %772 = vsyncpa [#allocation3], 1
    %773 = vsyncpa [#allocation6], 1
    %774 = vsyncpa [#allocation9], 1
    %775 = vsyncpa [#allocation4], 1

</llo_original>
